<compile_context>
chip_gen: v6e
topology: v6e:2x2x1
jax: 0.10.0
libtpu: 0.0.40
codegen_flags: <defaults>
</compile_context>

<pallas_src>
import functools

import numpy as np
import jax
import jax.numpy as jnp
from jax.experimental import pallas as pl
from jax.experimental.pallas import tpu as pltpu


def _round_up(x: int, m: int) -> int:
    return ((x + m - 1) // m) * m


def _bspec(block_shape, index_map, buffers=None):
    """BlockSpec helper: optionally request a non-default buffer count."""
    if buffers is None:
        return pl.BlockSpec(block_shape, index_map)
    try:
        return pl.BlockSpec(block_shape, index_map,
                            pipeline_mode=pl.Buffered(buffers))
    except (TypeError, AttributeError):
        # Older jax without pipeline_mode — fall back to default buffering.
        return pl.BlockSpec(block_shape, index_map)


def _make_kernel(seq_valid, seq_pad, hid_pad, tq, mxu_dtype, out_dtype,
                 with_weights):
    """Build the per-(batch, query-tile) kernel with static shape params."""
    mask_keys = seq_pad != seq_valid
    same_cast = (out_dtype == mxu_dtype)

    def kernel(x_ref, wt_ref, b_ref, *refs):
        # x_ref:    (Sp, Hp)   full (padded) sequence of this batch element
        # wt_ref:   (Hp, Hp)   pre-transposed projection weight (W^T), mxu dtype
        # b_ref:    (1,  Hp)   projection bias (f32)
        # ctx_ref:  (TQ, Hp)   context output tile
        # wts_ref:  (TQ, Sp)   attention-weights output tile (optional)
        # proj_ref: (Sp, Hp)   VMEM scratch holding attn_proj(lstm_output)
        if with_weights:
            ctx_ref, wts_ref, proj_ref = refs
        else:
            ctx_ref, proj_ref = refs
            wts_ref = None

        qi = pl.program_id(1)

        # Projection computed once per batch element (qi == 0), reused by all
        # query tiles of that batch element (qi axis is "arbitrary").
        @pl.when(qi == 0)
        def _():
            p = jnp.dot(x_ref[...].astype(mxu_dtype), wt_ref[...],
                        preferred_element_type=jnp.float32)          # (Sp, Hp)
            p = p + b_ref[...]
            proj_ref[...] = p.astype(proj_ref.dtype)

        q0 = pl.multiple_of(qi * tq, tq)
        xq = x_ref[pl.ds(q0, tq), :]                                  # (TQ, Hp)

        # scores = xq @ proj^T  — NT matmul, no transpose materialized.
        scores = jax.lax.dot_general(
            xq.astype(mxu_dtype), proj_ref[...],
            dimension_numbers=(((1,), (1,)), ((), ())),
            preferred_element_type=jnp.float32)                       # (TQ, Sp)

        if mask_keys:
            key_ids = jax.lax.broadcasted_iota(jnp.int32, (tq, seq_pad), 1)
            scores = jnp.where(key_ids < seq_valid, scores, jnp.float32(-1e30))

        # Numerically stable softmax along keys, entirely in f32.
        m = jnp.max(scores, axis=-1, keepdims=True)
        e = jnp.exp(scores - m)
        denom = jnp.sum(e, axis=-1, keepdims=True)
        # Exact division (no approx reciprocal): returned weights/context match
        # torch.softmax to f32 precision.
        weights = e / denom                                           # (TQ, Sp)

        w_out = weights.astype(out_dtype)          # single cast pass
        if with_weights:
            wts_ref[...] = w_out
        w_mm = w_out if same_cast else weights.astype(mxu_dtype)

        # context = weights @ x
        ctx = jnp.dot(w_mm, x_ref[...].astype(mxu_dtype),
                      preferred_element_type=jnp.float32)             # (TQ, Hp)
        ctx_ref[...] = ctx.astype(ctx_ref.dtype)

    return kernel


def attention_forward(lstm_output, w, b, *, tq_max: int = 256,
                      return_weights: bool = True, mxu_dtype=None):
    """lstm_output: (B, S, H), w: (H, H), b: (H,).

    Returns (context (B,S,H), weights (B,S,S)) or just context when
    return_weights=False.  Pass mxu_dtype=jnp.bfloat16 to run the matmuls on
    the bf16 MXU path (f32 accumulation, f32 softmax)."""
    B, S, H = lstm_output.shape
    in_dtype = np.dtype(lstm_output.dtype)
    out_dtype = in_dtype
    mxu = np.dtype(mxu_dtype) if mxu_dtype is not None else in_dtype

    # Pad sequence / hidden dims to lane-dense multiples of 128.
    Sp = _round_up(S, 128)
    Hp = _round_up(H, 128)

    if Sp != S or Hp != H:
        x_p = jnp.zeros((B, Sp, Hp), in_dtype).at[:, :S, :H].set(lstm_output)
    else:
        x_p = lstm_output
    if Hp != H:
        w_p = jnp.zeros((Hp, Hp), w.dtype).at[:H, :H].set(w)
        b_p = jnp.zeros((Hp,), b.dtype).at[:H].set(b)
    else:
        w_p, b_p = w, b

    # Pre-transpose W once (nn.Linear: y = x @ W.T + b  ->  x @ Wt + b).
    wt = jnp.transpose(w_p).astype(mxu)                   # (Hp, Hp)
    b2 = b_p.reshape(1, Hp).astype(jnp.float32)           # (1, Hp)

    # Query-tile size: largest of (256, 128) that divides Sp.
    tq = 128
    for cand in (256, 128):
        if cand <= tq_max and Sp % cand == 0:
            tq = cand
            break
    n_q = Sp // tq

    kernel = _make_kernel(S, Sp, Hp, tq, mxu, out_dtype, return_weights)

    e_in, e_out, e_mxu = in_dtype.itemsize, out_dtype.itemsize, mxu.itemsize

    ctx_spec = pl.BlockSpec((None, tq, Hp), lambda bi, qi: (bi, qi, 0))
    if return_weights:
        out_shape = (jax.ShapeDtypeStruct((B, Sp, Hp), out_dtype),   # context
                     jax.ShapeDtypeStruct((B, Sp, Sp), out_dtype))   # weights
        out_specs = [ctx_spec,
                     pl.BlockSpec((None, tq, Sp), lambda bi, qi: (bi, qi, 0))]
    else:
        out_shape = jax.ShapeDtypeStruct((B, Sp, Hp), out_dtype)
        out_specs = ctx_spec

    grid_spec = pltpu.PrefetchScalarGridSpec(
        num_scalar_prefetch=0,
        grid=(B, n_q),
        in_specs=[
            # Full (padded) sequence for this batch element; fetched once per b.
            pl.BlockSpec((None, Sp, Hp), lambda bi, qi: (bi, 0, 0)),
            # Grid-invariant projection weight / bias: single-buffered.
            _bspec((Hp, Hp), lambda bi, qi: (0, 0), buffers=1),
            _bspec((1, Hp), lambda bi, qi: (0, 0), buffers=1),
        ],
        out_specs=out_specs,
        scratch_shapes=[
            pltpu.VMEM((Sp, Hp), mxu),   # attn_proj(lstm_output), reused per qi
        ],
    )

    # Explicit VMEM budget for the intended residency (double-buffered x,
    # proj scratch, single-buffered W^T/bias, output buffers, softmax temps).
    vmem_bytes = (
        2 * Sp * Hp * e_in                 # x (double-buffered)
        + Sp * Hp * e_mxu                  # proj scratch
        + Hp * Hp * e_mxu                  # W^T (single-buffered)
        + Hp * 4                           # bias
        + 2 * tq * Hp * e_out              # context output buffers
        + (2 * tq * Sp * e_out if return_weights else 0)
        + 16 * tq * Sp                     # f32 softmax temporaries + slack
    )
    vmem_limit = min(max(int(vmem_bytes * 1.3) + (1 << 20), 32 << 20), 96 << 20)

    flops = 2 * B * S * H * H + 4 * B * S * S * H
    bytes_accessed = (B * S * H * e_in + Hp * Hp * e_mxu + Hp * 4
                      + B * S * H * e_out
                      + (B * S * S * e_out if return_weights else 0))
    cost = pl.CostEstimate(flops=flops, transcendentals=B * S * S,
                           bytes_accessed=bytes_accessed)

    result = pl.pallas_call(
        kernel,
        out_shape=out_shape,
        grid_spec=grid_spec,
        compiler_params=pltpu.CompilerParams(
            # batch axis parallel (megacore); query-tile axis is sequential
            # because the proj scratch is written at qi == 0 and reused.
            dimension_semantics=("parallel", "arbitrary"),
            vmem_limit_bytes=vmem_limit,
        ),
        cost_estimate=cost,
    )(x_p, wt, b2)

    if return_weights:
        ctx_p, wts_p = result
        return ctx_p[:, :S, :H], wts_p[:, :S, :S]
    return result[:, :S, :H]


def attention_reference(lstm_output, w, b):
    proj = jnp.einsum("bsh,kh->bsk", lstm_output, w) + b
    scores = jnp.einsum("bsh,bth->bst", lstm_output, proj)
    weights = jax.nn.softmax(scores, axis=-1)
    context = jnp.einsum("bst,bth->bsh", weights, lstm_output)
    return context, weights


if __name__ == "__main__":
    B, S, H = 2, 8, 32
    key = jax.random.PRNGKey(0)
    kx, kw, kb = jax.random.split(key, 3)

    # nn.Linear-style init: U(-1/sqrt(H), 1/sqrt(H))
    bound = 1.0 / (H ** 0.5)
    w = jax.random.uniform(kw, (H, H), jnp.float32, -bound, bound)
    b = jax.random.uniform(kb, (H,), jnp.float32, -bound, bound)
    lstm_output = jax.random.normal(kx, (B, S, H), jnp.float32)

    ref_ctx, ref_wts = attention_reference(lstm_output, w, b)

    # Default path: exact f32 parity with torch.softmax / torch.bmm.
    fwd = jax.jit(functools.partial(attention_forward))
    context, weights = fwd(lstm_output, w, b)
    jax.block_until_ready((context, weights))
    assert jnp.allclose(context, ref_ctx, atol=2e-3, rtol=2e-3), (
        float(jnp.max(jnp.abs(context - ref_ctx))))
    assert jnp.allclose(weights, ref_wts, atol=2e-3, rtol=2e-3), (
        float(jnp.max(jnp.abs(weights - ref_wts))))
    assert jnp.allclose(jnp.sum(weights, axis=-1), 1.0, atol=1e-3)

    # Context-only fast path (skips the (B,S,S) weights writeback).
    ctx_only = jax.jit(
        functools.partial(attention_forward, return_weights=False)
    )(lstm_output, w, b)
    jax.block_until_ready(ctx_only)
    assert jnp.allclose(ctx_only, ref_ctx, atol=2e-3, rtol=2e-3)

    # Optional bf16 MXU path (f32 accumulation / f32 softmax): sanity check.
    ctx_bf16, wts_bf16 = jax.jit(
        functools.partial(attention_forward, mxu_dtype=jnp.bfloat16)
    )(lstm_output, w, b)
    jax.block_until_ready((ctx_bf16, wts_bf16))
    assert jnp.allclose(ctx_bf16, ref_ctx, atol=2e-1, rtol=2e-1)

    print("KERNEL_OK")
</pallas_src>

<mosaic_0001>
module attributes {stable_mosaic.version = 11 : i64} {
  func.func @kernel(%arg0: i32, %arg1: i32, %arg2: memref<1x128x128xf32, #tpu.memory_space<vmem>>, %arg3: memref<128x128xf32, #tpu.memory_space<vmem>>, %arg4: memref<1x128xf32, #tpu.memory_space<vmem>>, %arg5: memref<1x128x128xf32, #tpu.memory_space<vmem>>, %arg6: memref<1x128x128xf32, #tpu.memory_space<vmem>>, %arg7: memref<128x128xf32, #tpu.memory_space<vmem>>) attributes {dimension_semantics = [#tpu.dimension_semantics<parallel>, #tpu.dimension_semantics<arbitrary>], iteration_bounds = array<i64: 2, 1>, scalar_prefetch = 0 : i64, scratch_operands = 1 : i64, tpu.core_type = #tpu.core_type<tc>, window_params = [{transform_indices = @transform_0, window_bounds = array<i64: 1, 128, 128>}, {pipeline_mode = #tpu.pipeline_mode<synchronous>, transform_indices = @transform_1, window_bounds = array<i64: 128, 128>}, {pipeline_mode = #tpu.pipeline_mode<synchronous>, transform_indices = @transform_2, window_bounds = array<i64: 1, 128>}, {transform_indices = @transform_3, window_bounds = array<i64: 1, 128, 128>}, {transform_indices = @transform_4, window_bounds = array<i64: 1, 128, 128>}]} {
    %c0_i32 = arith.constant 0 : i32
    %0 = arith.cmpi eq, %arg1, %c0_i32 : i32
    %1 = arith.extui %0 : i1 to i32
    %c0_i32_0 = arith.constant 0 : i32
    %2 = arith.cmpi ne, %1, %c0_i32_0 : i32
    scf.if %2 {
      %c0_17 = arith.constant 0 : index
      %c0_18 = arith.constant 0 : index
      %c0_19 = arith.constant 0 : index
      %33 = vector.load %arg2[%c0_17, %c0_18, %c0_19] : memref<1x128x128xf32, #tpu.memory_space<vmem>>, vector<1x128x128xf32>
      %34 = vector.shape_cast %33 : vector<1x128x128xf32> to vector<128x128xf32>
      %c0_20 = arith.constant 0 : index
      %c0_21 = arith.constant 0 : index
      %35 = vector.load %arg3[%c0_20, %c0_21] : memref<128x128xf32, #tpu.memory_space<vmem>>, vector<128x128xf32>
      %cst_22 = arith.constant dense<0.000000e+00> : vector<128x128xf32>
      %36 = tpu.matmul %34, %35, %cst_22 {dimension_numbers = #tpu.dot_dimension_numbers<[1], [0], [0], [1], [0, 0, 1, 1], [], []>} : vector<128x128xf32>, vector<128x128xf32>, vector<128x128xf32> -> vector<128x128xf32>
      %c0_23 = arith.constant 0 : index
      %c0_24 = arith.constant 0 : index
      %37 = vector.load %arg4[%c0_23, %c0_24] : memref<1x128xf32, #tpu.memory_space<vmem>>, vector<1x128xf32>
      %38 = vector.broadcast %37 : vector<1x128xf32> to vector<128x128xf32>
      %39 = arith.addf %36, %38 : vector<128x128xf32>
      %c0_25 = arith.constant 0 : index
      %c0_26 = arith.constant 0 : index
      %40 = vector.load %arg7[%c0_25, %c0_26] : memref<128x128xf32, #tpu.memory_space<vmem>>, vector<128x128xf32>
      tpu.vector_store %arg7[%c0_25, %c0_26], %39 {strides = array<i32>} : memref<128x128xf32, #tpu.memory_space<vmem>>, vector<128x128xf32>,
    } else {
    }
    %c128_i32 = arith.constant 128 : i32
    %3 = arith.muli %arg1, %c128_i32 : i32
    %4 = tpu.assume_multiple %3, 128 : i32
    %c0 = arith.constant 0 : index
    %5 = arith.index_cast %4 : i32 to index
    %c0_1 = arith.constant 0 : index
    %6 = vector.load %arg2[%c0, %5, %c0_1] : memref<1x128x128xf32, #tpu.memory_space<vmem>>, vector<1x128x128xf32>
    %7 = vector.shape_cast %6 : vector<1x128x128xf32> to vector<128x128xf32>
    %c0_2 = arith.constant 0 : index
    %c0_3 = arith.constant 0 : index
    %8 = vector.load %arg7[%c0_2, %c0_3] : memref<128x128xf32, #tpu.memory_space<vmem>>, vector<128x128xf32>
    %cst = arith.constant dense<0.000000e+00> : vector<128x128xf32>
    %9 = tpu.matmul %7, %8, %cst {dimension_numbers = #tpu.dot_dimension_numbers<[1], [1], [0], [0], [0, 0, 1, 0], [], []>} : vector<128x128xf32>, vector<128x128xf32>, vector<128x128xf32> -> vector<128x128xf32>
    %10 = tpu.iota {dimensions = array<i32: 1>} : vector<128x128xi32>
    %c8_i32 = arith.constant 8 : i32
    %11 = vector.broadcast %c8_i32 : i32 to vector<128x128xi32>
    %12 = arith.cmpi slt, %10, %11 : vector<128x128xi32>
    %cst_4 = arith.constant -1.000000e+30 : f32
    %13 = vector.broadcast %cst_4 : f32 to vector<128x128xf32>
    %14 = arith.select %12, %9, %13 : vector<128x128xi1>, vector<128x128xf32>
    %cst_5 = arith.constant dense<0xFF800000> : vector<128xf32>
    %15 = vector.multi_reduction <maximumf>, %14, %cst_5 [1] : vector<128x128xf32> to vector<128xf32>
    %16 = vector.shape_cast %15 : vector<128xf32> to vector<128x1xf32>
    %17 = vector.broadcast %16 : vector<128x1xf32> to vector<128x128xf32>
    %18 = arith.subf %14, %17 : vector<128x128xf32>
    %19 = math.exp %18 : vector<128x128xf32>
    %cst_6 = arith.constant dense<0.000000e+00> : vector<128xf32>
    %20 = vector.multi_reduction <add>, %19, %cst_6 [1] : vector<128x128xf32> to vector<128xf32>
    %21 = vector.shape_cast %20 : vector<128xf32> to vector<128x1xf32>
    %22 = vector.broadcast %21 : vector<128x1xf32> to vector<128x128xf32>
    %23 = arith.divf %19, %22 : vector<128x128xf32>
    %c0_7 = arith.constant 0 : index
    %c0_8 = arith.constant 0 : index
    %c0_9 = arith.constant 0 : index
    %24 = vector.load %arg6[%c0_7, %c0_8, %c0_9] : memref<1x128x128xf32, #tpu.memory_space<vmem>>, vector<1x128x128xf32>
    %25 = vector.shape_cast %24 : vector<1x128x128xf32> to vector<128x128xf32>
    %26 = vector.shape_cast %23 : vector<128x128xf32> to vector<1x128x128xf32>
    tpu.vector_store %arg6[%c0_7, %c0_8, %c0_9], %26 {strides = array<i32>} : memref<1x128x128xf32, #tpu.memory_space<vmem>>, vector<1x128x128xf32>,
    %c0_10 = arith.constant 0 : index
    %c0_11 = arith.constant 0 : index
    %c0_12 = arith.constant 0 : index
    %27 = vector.load %arg2[%c0_10, %c0_11, %c0_12] : memref<1x128x128xf32, #tpu.memory_space<vmem>>, vector<1x128x128xf32>
    %28 = vector.shape_cast %27 : vector<1x128x128xf32> to vector<128x128xf32>
    %cst_13 = arith.constant dense<0.000000e+00> : vector<128x128xf32>
    %29 = tpu.matmul %23, %28, %cst_13 {dimension_numbers = #tpu.dot_dimension_numbers<[1], [0], [0], [1], [0, 0, 1, 1], [], []>} : vector<128x128xf32>, vector<128x128xf32>, vector<128x128xf32> -> vector<128x128xf32>
    %c0_14 = arith.constant 0 : index
    %c0_15 = arith.constant 0 : index
    %c0_16 = arith.constant 0 : index
    %30 = vector.load %arg5[%c0_14, %c0_15, %c0_16] : memref<1x128x128xf32, #tpu.memory_space<vmem>>, vector<1x128x128xf32>
    %31 = vector.shape_cast %30 : vector<1x128x128xf32> to vector<128x128xf32>
    %32 = vector.shape_cast %29 : vector<128x128xf32> to vector<1x128x128xf32>
    tpu.vector_store %arg5[%c0_14, %c0_15, %c0_16], %32 {strides = array<i32>} : memref<1x128x128xf32, #tpu.memory_space<vmem>>, vector<1x128x128xf32>,
    return
  }
  func.func @transform_0(%arg0: i32, %arg1: i32) -> (i32, i32, i32) {
    %c0_i32 = arith.constant 0 : i32
    %c0_i32_0 = arith.constant 0 : i32
    %c0_i32_1 = arith.constant 0 : i32
    return %arg0, %c0_i32, %c0_i32_0 : i32, i32, i32
  }
  func.func @transform_1(%arg0: i32, %arg1: i32) -> (i32, i32) {
    %c0_i32 = arith.constant 0 : i32
    %c0_i32_0 = arith.constant 0 : i32
    %c0_i32_1 = arith.constant 0 : i32
    return %c0_i32, %c0_i32_0 : i32, i32
  }
  func.func @transform_2(%arg0: i32, %arg1: i32) -> (i32, i32) {
    %c0_i32 = arith.constant 0 : i32
    %c0_i32_0 = arith.constant 0 : i32
    %c0_i32_1 = arith.constant 0 : i32
    return %c0_i32, %c0_i32_0 : i32, i32
  }
  func.func @transform_3(%arg0: i32, %arg1: i32) -> (i32, i32, i32) {
    %c0_i32 = arith.constant 0 : i32
    %c0_i32_0 = arith.constant 0 : i32
    return %arg0, %arg1, %c0_i32 : i32, i32, i32
  }
  func.func @transform_4(%arg0: i32, %arg1: i32) -> (i32, i32, i32) {
    %c0_i32 = arith.constant 0 : i32
    %c0_i32_0 = arith.constant 0 : i32
    return %arg0, %arg1, %c0_i32 : i32, i32, i32
  }
}

</mosaic_0001>

<llo_original>
// kernel: attention_forward.1
$region0: #{attention_forward.1}
  #allocation0 [shape = 'u32[]', space=smem, size = 0x4, offset = 0x4, fixed_abs, tag = 'smem constant byte address 0x4 - core index']
  #allocation1 [shape = 'u32[144,128]{1,0:T(1,128)}', space=vmem, size = 0x12000, scoped, tag = 'internal scratch']
  #allocation2 [shape = 'f32[128,128]{1,0:T(8,128)}', space=vmem, size = 0x10000, scoped, tag = 'scratch operand']
  %s0 = inlined_call_operand.vmem [shape: f32[2,128,128], index: 0, kind: input, shape index: {}]
  %s1 = inlined_call_operand.vmem [shape: f32[128,128], index: 1, kind: input, shape index: {}]
  %s2 = inlined_call_operand.vmem [shape: f32[1,128], index: 2, kind: input, shape index: {}]
  %s3 = inlined_call_operand.vmem [shape: f32[2,128,128], index: 3, kind: output, shape index: {0}]
  %s4 = inlined_call_operand.vmem [shape: f32[2,128,128], index: 4, kind: output, shape index: {1}]
  %5 = xla_tuple %s3, %s4
  %s6 = sld [smem:[#allocation0]]
  $region57: #{attention_forward.1} parent=0
    _
  %s8 = ssub.s32 1, %s6
  %s9 = scalar_select 0, %s8, %s6
  loop: start=0, step=1, limit=4
  $region2: #{attention_forward.1} parent=0 // loop_pre_header
    _
  $region3: #{attention_forward.1} parent=0 // loop_header
    %s11 = sphi 0, %s15
    %p12 = scmp.ge.s32.totalorder %s11, 4
    %s18 = sphi 0, %s30
    %s19 = sphi 0, %s26
    %s20 = sphi 0, %s18
    %s21 = sphi 0, %s19
    %s22 = sphi 0, %s20
    %s23 = sphi 0, %s21
    %s33 = sphi 0, %s35
    %s36 = sphi 0, %s33
    %s37 = sphi 0, %s36
    %s53 = sphi 0, %s37
    %s57 = sphi 0, %s57
    %s59 = sphi 0, %s57
    %s60 = sphi 0, %s59
    %s74 = sphi 0, %s60
    %s78 = sphi 0, %s78
    %s80 = sphi 0, %s78
    %s81 = sphi 0, %s80
    %s95 = sphi 0, %s81
    %s103 = sphi 0, %s105
    %s106 = sphi 0, %s103
    %s107 = sphi 0, %s106
    %s123 = sphi 0, %s107
    %s131 = sphi 0, %s133
    %s134 = sphi 0, %s131
    %s135 = sphi 0, %s134
    %s151 = sphi 0, %s135
  $region4: #{attention_forward.1} parent=0 // loop_header_branch
    %14 = sbr.rel (%p12) target = $region8
  $region5: #{attention_forward.1} parent=0 // loop_body
    %s16 = ssub.s32 %s11, 1
    %s17 = ssub.s32 %s11, 2
    %s24 = sadd.s32 1, %s19
    %p25 = scmp.ge.s32.totalorder %s24, 1
    %s26 = scalar_select %p25, 0, %s24
    %s27 = sadd.s32 1, %s18
    %s28 = scalar_select %p25, %s27, %s18
    %p29 = scmp.ge.s32.totalorder %s28, 2
    %s30 = scalar_select %p29, 0, %s28
    %s31 = ssub.s32 %s18, %s30
    %p32 = scmp.eq.s32.totalorder %s31, 0
    %s34 = sadd.s32 %s33, 1
    %s35 = scalar_select %p32, %s33, %s34
    %p38 = pneg %p32
    %p39 = scmp.eq.s32.totalorder %s11, 1
    %p40 = por %p38, %p39
    %p41 = scmp.ne.s32.totalorder %s33, %s36
    %p42 = scmp.eq.s32.totalorder %s11, 0
    %p43 = por %p41, %p42
    %p44 = scmp.ne.s32.totalorder %s33, %s36
    %p45 = scmp.eq.s32.totalorder %s16, 1
    %p46 = por %p44, %p45
    %p47 = scmp.ne.s32.totalorder %s36, %s37
    %p48 = scmp.eq.s32.totalorder %s16, 0
    %p49 = por %p47, %p48
    %p50 = scmp.ne.s32.totalorder %s36, %s37
    %p51 = scmp.eq.s32.totalorder %s17, 1
    %p52 = por %p50, %p51
    %p54 = scmp.ne.s32.totalorder %s37, %s53
    %p55 = scmp.eq.s32.totalorder %s17, 0
    %p56 = por %p54, %p55
    %s58 = sadd.s32 %s57, 1
    %p61 = scmp.eq.s32.totalorder %s11, 1
    %p62 = scmp.ne.s32.totalorder %s57, %s59
    %p63 = scmp.eq.s32.totalorder %s11, 0
    %p64 = por %p62, %p63
    %p65 = scmp.ne.s32.totalorder %s57, %s59
    %p66 = scmp.eq.s32.totalorder %s16, 1
    %p67 = por %p65, %p66
    %p68 = scmp.ne.s32.totalorder %s59, %s60
    %p69 = scmp.eq.s32.totalorder %s16, 0
    %p70 = por %p68, %p69
    %p71 = scmp.ne.s32.totalorder %s59, %s60
    %p72 = scmp.eq.s32.totalorder %s17, 1
    %p73 = por %p71, %p72
    %p75 = scmp.ne.s32.totalorder %s60, %s74
    %p76 = scmp.eq.s32.totalorder %s17, 0
    %p77 = por %p75, %p76
    %s79 = sadd.s32 %s78, 1
    %p82 = scmp.eq.s32.totalorder %s11, 1
    %p83 = scmp.ne.s32.totalorder %s78, %s80
    %p84 = scmp.eq.s32.totalorder %s11, 0
    %p85 = por %p83, %p84
    %p86 = scmp.ne.s32.totalorder %s78, %s80
    %p87 = scmp.eq.s32.totalorder %s16, 1
    %p88 = por %p86, %p87
    %p89 = scmp.ne.s32.totalorder %s80, %s81
    %p90 = scmp.eq.s32.totalorder %s16, 0
    %p91 = por %p89, %p90
    %p92 = scmp.ne.s32.totalorder %s80, %s81
    %p93 = scmp.eq.s32.totalorder %s17, 1
    %p94 = por %p92, %p93
    %p96 = scmp.ne.s32.totalorder %s81, %s95
    %p97 = scmp.eq.s32.totalorder %s17, 0
    %p98 = por %p96, %p97
    %s99 = ssub.s32 %s18, %s30
    %s100 = ssub.s32 %s19, %s26
    %s101 = sor.u32 %s99, %s100
    %p102 = scmp.eq.s32.totalorder %s101, 0
    %s104 = sadd.s32 %s103, 1
    %s105 = scalar_select %p102, %s103, %s104
    %p108 = pneg %p102
    %p109 = scmp.eq.s32.totalorder %s11, 1
    %p110 = por %p108, %p109
    %p111 = scmp.ne.s32.totalorder %s103, %s106
    %p112 = scmp.eq.s32.totalorder %s11, 0
    %p113 = por %p111, %p112
    %p114 = scmp.ne.s32.totalorder %s103, %s106
    %p115 = scmp.eq.s32.totalorder %s16, 1
    %p116 = por %p114, %p115
    %p117 = scmp.ne.s32.totalorder %s106, %s107
    %p118 = scmp.eq.s32.totalorder %s16, 0
    %p119 = por %p117, %p118
    %p120 = scmp.ne.s32.totalorder %s106, %s107
    %p121 = scmp.eq.s32.totalorder %s17, 1
    %p122 = por %p120, %p121
    %p124 = scmp.ne.s32.totalorder %s107, %s123
    %p125 = scmp.eq.s32.totalorder %s17, 0
    %p126 = por %p124, %p125
    %s127 = ssub.s32 %s18, %s30
    %s128 = ssub.s32 %s19, %s26
    %s129 = sor.u32 %s127, %s128
    %p130 = scmp.eq.s32.totalorder %s129, 0
    %s132 = sadd.s32 %s131, 1
    %s133 = scalar_select %p130, %s131, %s132
    %p136 = pneg %p130
    %p137 = scmp.eq.s32.totalorder %s11, 1
    %p138 = por %p136, %p137
    %p139 = scmp.ne.s32.totalorder %s131, %s134
    %p140 = scmp.eq.s32.totalorder %s11, 0
    %p141 = por %p139, %p140
    %p142 = scmp.ne.s32.totalorder %s131, %s134
    %p143 = scmp.eq.s32.totalorder %s16, 1
    %p144 = por %p142, %p143
    %p145 = scmp.ne.s32.totalorder %s134, %s135
    %p146 = scmp.eq.s32.totalorder %s16, 0
    %p147 = por %p145, %p146
    %p148 = scmp.ne.s32.totalorder %s134, %s135
    %p149 = scmp.eq.s32.totalorder %s17, 1
    %p150 = por %p148, %p149
    %p152 = scmp.ne.s32.totalorder %s135, %s151
    %p153 = scmp.eq.s32.totalorder %s17, 0
    %p154 = por %p152, %p153
    %p155 = scmp.le.s32.totalorder 1, %s11
    %p156 = scmp.lt.s32.totalorder %s11, 3
    %p157 = pnand %p155, %p156
    %p158 = pneg %p157
    // Predicated region
    $region9: #{attention_forward.1} parent=5 // pred_check
      _
    $region10: #{attention_forward.1} parent=5 // pred_check_branch
      %160 = sbr.rel (%p157) target = $region12
    $region11: #{attention_forward.1} parent=5 // pred_region
      %s161 = ssub.s32 %s11, 1
      // Predicated region
      $region13: #{attention_forward.1} parent=11 // pred_check
        %p162 = pneg %p70
      $region14: #{attention_forward.1} parent=11 // pred_check_branch
        %164 = sbr.rel (%p162) target = $region16
      $region15: #{attention_forward.1} parent=11 // pred_region
        _
      $region16: #{attention_forward.1} parent=11 // pred_fallthru
        _
      // Predicated region
      $region17: #{attention_forward.1} parent=11 // pred_check
        %p165 = pneg %p91
      $region18: #{attention_forward.1} parent=11 // pred_check_branch
        %167 = sbr.rel (%p165) target = $region20
      $region19: #{attention_forward.1} parent=11 // pred_region
        _
      $region20: #{attention_forward.1} parent=11 // pred_fallthru
        _
    $region12: #{attention_forward.1} parent=5 // pred_fallthru
      _
    %p168 = scmp.lt.s32.totalorder %s11, 2
    // Predicated region
    $region21: #{attention_forward.1} parent=5 // pred_check
      %p169 = pneg %p168
    $region22: #{attention_forward.1} parent=5 // pred_check_branch
      %171 = sbr.rel (%p169) target = $region24
    $region23: #{attention_forward.1} parent=5 // pred_region
      // Predicated region
      $region25: #{attention_forward.1} parent=23 // pred_check
        %p172 = pneg %p43
      $region26: #{attention_forward.1} parent=23 // pred_check_branch
        %174 = sbr.rel (%p172) target = $region28
      $region27: #{attention_forward.1} parent=23 // pred_region
        %p175 = scmp.lt.s32.totalorder %s18, 1
        %s176 = scalar_select %p175, %s18, 1
        %s177 = smul.addr %s176, 16
        %s178 = smul.addr %s177, 8
        %s179 = scalar_lea.vmem %s0, %s178
      $region28: #{attention_forward.1} parent=23 // pred_fallthru
        _
    $region24: #{attention_forward.1} parent=5 // pred_fallthru
      _
    %p180 = scmp.le.s32.totalorder 1, %s11
    %p181 = scmp.lt.s32.totalorder %s11, 3
    %p182 = pnand %p180, %p181
    %p183 = pneg %p182
    // Predicated region
    $region29: #{attention_forward.1} parent=5 // pred_check
      _
    $region30: #{attention_forward.1} parent=5 // pred_check_branch
      %185 = sbr.rel (%p182) target = $region32
    $region31: #{attention_forward.1} parent=5 // pred_region
      %s186 = ssub.s32 %s11, 1
      %p187 = scmp.lt.s32.totalorder %s20, 1
      %s188 = scalar_select %p187, %s20, 1
      %s189 = smul.addr %s188, 16
      %s190 = smul.addr %s189, 8
      %s191 = scalar_lea.vmem %s0, %s190
      %p192 = pneg %p49
      %p193 = pneg %p46
      %p194 = pneg %p70
      %p195 = pneg %p67
      %p196 = pneg %p91
      %p197 = pneg %p88
      %p198 = pneg %p119
      %p199 = pneg %p116
      %s200 = smul.u32 16, %s21
      %p201 = scmp.lt.s32.totalorder %s20, 1
      %s202 = scalar_select %p201, %s20, 1
      %p203 = scmp.lt.s32.totalorder %s200, 15
      %s204 = scalar_select %p203, %s200, 15
      %s205 = smul.addr %s202, 16
      %s206 = sadd.s32 %s204, %s205
      %s207 = smul.addr %s206, 8
      %s208 = scalar_lea.vmem %s3, %s207
      %p209 = pneg %p147
      %p210 = pneg %p144
      %s211 = smul.u32 16, %s21
      %p212 = scmp.lt.s32.totalorder %s20, 1
      %s213 = scalar_select %p212, %s20, 1
      %p214 = scmp.lt.s32.totalorder %s211, 15
      %s215 = scalar_select %p214, %s211, 15
      %s216 = smul.addr %s213, 16
      %s217 = sadd.s32 %s215, %s216
      %s218 = smul.addr %s217, 8
      %s219 = scalar_lea.vmem %s4, %s218
      %p220 = scmp.lt.s32.totalorder %s20, 1
      %s221 = scalar_select %p220, %s20, 1
      %s222 = smul.addr %s221, 16
      %s223 = smul.addr %s222, 8
      %s224 = scalar_lea.vmem %s0, %s223
      %s225 = smul.u32 16, %s21
      %p226 = scmp.lt.s32.totalorder %s20, 1
      %s227 = scalar_select %p226, %s20, 1
      %p228 = scmp.lt.s32.totalorder %s225, 15
      %s229 = scalar_select %p228, %s225, 15
      %s230 = smul.addr %s227, 16
      %s231 = sadd.s32 %s229, %s230
      %s232 = smul.addr %s231, 8
      %s233 = scalar_lea.vmem %s3, %s232
      %s234 = smul.u32 16, %s21
      %s235 = smul.u32 16, %s21
      %p236 = scmp.lt.s32.totalorder %s20, 1
      %s237 = scalar_select %p236, %s20, 1
      %p238 = scmp.lt.s32.totalorder %s235, 15
      %s239 = scalar_select %p238, %s235, 15
      %s240 = smul.addr %s237, 16
      %s241 = sadd.s32 %s239, %s240
      %s242 = smul.addr %s241, 8
      %s243 = scalar_lea.vmem %s4, %s242
      %s244 = smul.u32 16, %s21
      %p245 = scmp.eq.s32.totalorder %s21, 0
      // Predicated region
      $region33: #{attention_forward.1} parent=31 // pred_check
        %p246 = pneg %p245
      $region34: #{attention_forward.1} parent=31 // pred_check_branch
        %248 = sbr.rel (%p246) target = $region36
      $region35: #{attention_forward.1} parent=31 // pred_region
        %v249 = vld [vmem:[%s224] sm:$0xff]
        %v250 = vld [vmem:[%s224 + $0x8] sm:$0xff]
        %v251 = vld [vmem:[%s224 + $0x10] sm:$0xff]
        %v252 = vld [vmem:[%s224 + $0x18] sm:$0xff]
        %v253 = vld [vmem:[%s224 + $0x20] sm:$0xff]
        %v254 = vld [vmem:[%s224 + $0x28] sm:$0xff]
        %v255 = vld [vmem:[%s224 + $0x30] sm:$0xff]
        %v256 = vld [vmem:[%s224 + $0x38] sm:$0xff]
        %v257 = vld [vmem:[%s224 + $0x40] sm:$0xff]
        %v258 = vld [vmem:[%s224 + $0x48] sm:$0xff]
        %v259 = vld [vmem:[%s224 + $0x50] sm:$0xff]
        %v260 = vld [vmem:[%s224 + $0x58] sm:$0xff]
        %v261 = vld [vmem:[%s224 + $0x60] sm:$0xff]
        %v262 = vld [vmem:[%s224 + $0x68] sm:$0xff]
        %v263 = vld [vmem:[%s224 + $0x70] sm:$0xff]
        %v264 = vld [vmem:[%s224 + $0x78] sm:$0xff]
        %v265 = vld [vmem:[%s1] sm:$0xff]
        %v266 = vld [vmem:[%s1 + $0x8] sm:$0xff]
        %v267 = vld [vmem:[%s1 + $0x10] sm:$0xff]
        %v268 = vld [vmem:[%s1 + $0x18] sm:$0xff]
        %v269 = vld [vmem:[%s1 + $0x20] sm:$0xff]
        %v270 = vld [vmem:[%s1 + $0x28] sm:$0xff]
        %v271 = vld [vmem:[%s1 + $0x30] sm:$0xff]
        %v272 = vld [vmem:[%s1 + $0x38] sm:$0xff]
        %v273 = vld [vmem:[%s1 + $0x40] sm:$0xff]
        %v274 = vld [vmem:[%s1 + $0x48] sm:$0xff]
        %v275 = vld [vmem:[%s1 + $0x50] sm:$0xff]
        %v276 = vld [vmem:[%s1 + $0x58] sm:$0xff]
        %v277 = vld [vmem:[%s1 + $0x60] sm:$0xff]
        %v278 = vld [vmem:[%s1 + $0x68] sm:$0xff]
        %v279 = vld [vmem:[%s1 + $0x70] sm:$0xff]
        %v280 = vld [vmem:[%s1 + $0x78] sm:$0xff]
        %v281 = vld [vmem:[%s2] sm:$0x1]
        %v283 = vlaneseq
        %v284 = vshrl.u32 %v283, 7
        %v285 = vsub.s32 0, %v284
        %v286 = vrot.slane %v281, %v285
        %288 = vmatprep.subr.mxu0 0.0
        %289 = vmatpush1.msra.mxu0 %v280
        %290 = vmatprep.subr.mxu0 0.0
        %291 = vmatpush1.msra.mxu0 %v279
        %292 = vmatprep.subr.mxu0 0.0
        %293 = vmatpush1.msra.mxu0 %v278
        %294 = vmatprep.subr.mxu0 0.0
        %295 = vmatpush1.msra.mxu0 %v277
        %296 = vmatprep.subr.mxu0 0.0
        %297 = vmatpush1.msra.mxu0 %v276
        %298 = vmatprep.subr.mxu0 0.0
        %299 = vmatpush1.msra.mxu0 %v275
        %300 = vmatprep.subr.mxu0 0.0
        %301 = vmatpush1.msra.mxu0 %v274
        %302 = vmatprep.subr.mxu0 0.0
        %303 = vmatpush1.msra.mxu0 %v273
        %304 = vmatprep.subr.mxu0 0.0
        %305 = vmatpush1.msra.mxu0 %v272
        %306 = vmatprep.subr.mxu0 0.0
        %307 = vmatpush1.msra.mxu0 %v271
        %308 = vmatprep.subr.mxu0 0.0
        %309 = vmatpush1.msra.mxu0 %v270
        %310 = vmatprep.subr.mxu0 0.0
        %311 = vmatpush1.msra.mxu0 %v269
        %312 = vmatprep.subr.mxu0 0.0
        %313 = vmatpush1.msra.mxu0 %v268
        %314 = vmatprep.subr.mxu0 0.0
        %315 = vmatpush1.msra.mxu0 %v267
        %316 = vmatprep.subr.mxu0 0.0
        %317 = vmatpush1.msra.mxu0 %v266
        %318 = vmatprep.subr.mxu0 0.0
        %319 = vmatpush1.msra.mxu0 %v265
        %320 = vmatprep.subr.mxu0 0.0
        %321 = vmatpush2.msra.mxu0 0.0
        %322 = vmatprep.subr.mxu0 0.0
        %323 = vmatpush2.msra.mxu0 0.0
        %324 = vmatprep.subr.mxu0 0.0
        %325 = vmatpush2.msra.mxu0 0.0
        %326 = vmatprep.subr.mxu0 0.0
        %327 = vmatpush2.msra.mxu0 0.0
        %328 = vmatprep.subr.mxu0 0.0
        %329 = vmatpush2.msra.mxu0 0.0
        %330 = vmatprep.subr.mxu0 0.0
        %331 = vmatpush2.msra.mxu0 0.0
        %332 = vmatprep.subr.mxu0 0.0
        %333 = vmatpush2.msra.mxu0 0.0
        %334 = vmatprep.subr.mxu0 0.0
        %335 = vmatpush2.msra.mxu0 0.0
        %336 = vmatprep.subr.mxu0 0.0
        %337 = vmatpush2.msra.mxu0 0.0
        %338 = vmatprep.subr.mxu0 0.0
        %339 = vmatpush2.msra.mxu0 0.0
        %340 = vmatprep.subr.mxu0 0.0
        %341 = vmatpush2.msra.mxu0 0.0
        %342 = vmatprep.subr.mxu0 0.0
        %343 = vmatpush2.msra.mxu0 0.0
        %344 = vmatprep.subr.mxu0 0.0
        %345 = vmatpush2.msra.mxu0 0.0
        %346 = vmatprep.subr.mxu0 0.0
        %347 = vmatpush2.msra.mxu0 0.0
        %348 = vmatprep.subr.mxu0 0.0
        %349 = vmatpush2.msra.mxu0 0.0
        %350 = vmatprep.subr.mxu0 0.0
        %351 = vmatpush2.msra.mxu0 0.0
        %352 = vmatprep.mubr.f32.mxu0 0.0
        %353 = vmatmul.mubr.f32.gmra.mxu0 %v249
        %v354 = vpop.f32.mrf.mxu0
        %v355 = vadd.f32 %v286, %v354
        %v356 = vpop.f32.mrf.mxu0
        %357 = vmatprep.mubr.f32.mxu0 0.0
        %358 = vmatmul.mubr.f32.gmra.mxu0 %v250
        %v359 = vpop.f32.mrf.mxu0
        %v360 = vadd.f32 %v286, %v359
        %v361 = vpop.f32.mrf.mxu0
        %362 = vmatprep.mubr.f32.mxu0 0.0
        %363 = vmatmul.mubr.f32.gmra.mxu0 %v251
        %v364 = vpop.f32.mrf.mxu0
        %v365 = vadd.f32 %v286, %v364
        %v366 = vpop.f32.mrf.mxu0
        %367 = vmatprep.mubr.f32.mxu0 0.0
        %368 = vmatmul.mubr.f32.gmra.mxu0 %v252
        %v369 = vpop.f32.mrf.mxu0
        %v370 = vadd.f32 %v286, %v369
        %v371 = vpop.f32.mrf.mxu0
        %372 = vmatprep.mubr.f32.mxu0 0.0
        %373 = vmatmul.mubr.f32.gmra.mxu0 %v253
        %v374 = vpop.f32.mrf.mxu0
        %v375 = vadd.f32 %v286, %v374
        %v376 = vpop.f32.mrf.mxu0
        %377 = vmatprep.mubr.f32.mxu0 0.0
        %378 = vmatmul.mubr.f32.gmra.mxu0 %v254
        %v379 = vpop.f32.mrf.mxu0
        %v380 = vadd.f32 %v286, %v379
        %v381 = vpop.f32.mrf.mxu0
        %382 = vmatprep.mubr.f32.mxu0 0.0
        %383 = vmatmul.mubr.f32.gmra.mxu0 %v255
        %v384 = vpop.f32.mrf.mxu0
        %v385 = vadd.f32 %v286, %v384
        %v386 = vpop.f32.mrf.mxu0
        %387 = vmatprep.mubr.f32.mxu0 0.0
        %388 = vmatmul.mubr.f32.gmra.mxu0 %v256
        %v389 = vpop.f32.mrf.mxu0
        %v390 = vadd.f32 %v286, %v389
        %v391 = vpop.f32.mrf.mxu0
        %392 = vmatprep.mubr.f32.mxu0 0.0
        %393 = vmatmul.mubr.f32.gmra.mxu0 %v257
        %v394 = vpop.f32.mrf.mxu0
        %v395 = vadd.f32 %v286, %v394
        %v396 = vpop.f32.mrf.mxu0
        %397 = vmatprep.mubr.f32.mxu0 0.0
        %398 = vmatmul.mubr.f32.gmra.mxu0 %v258
        %v399 = vpop.f32.mrf.mxu0
        %v400 = vadd.f32 %v286, %v399
        %v401 = vpop.f32.mrf.mxu0
        %402 = vmatprep.mubr.f32.mxu0 0.0
        %403 = vmatmul.mubr.f32.gmra.mxu0 %v259
        %v404 = vpop.f32.mrf.mxu0
        %v405 = vadd.f32 %v286, %v404
        %v406 = vpop.f32.mrf.mxu0
        %407 = vmatprep.mubr.f32.mxu0 0.0
        %408 = vmatmul.mubr.f32.gmra.mxu0 %v260
        %v409 = vpop.f32.mrf.mxu0
        %v410 = vadd.f32 %v286, %v409
        %v411 = vpop.f32.mrf.mxu0
        %412 = vmatprep.mubr.f32.mxu0 0.0
        %413 = vmatmul.mubr.f32.gmra.mxu0 %v261
        %v414 = vpop.f32.mrf.mxu0
        %v415 = vadd.f32 %v286, %v414
        %v416 = vpop.f32.mrf.mxu0
        %417 = vmatprep.mubr.f32.mxu0 0.0
        %418 = vmatmul.mubr.f32.gmra.mxu0 %v262
        %v419 = vpop.f32.mrf.mxu0
        %v420 = vadd.f32 %v286, %v419
        %v421 = vpop.f32.mrf.mxu0
        %422 = vmatprep.mubr.f32.mxu0 0.0
        %423 = vmatmul.mubr.f32.gmra.mxu0 %v263
        %v424 = vpop.f32.mrf.mxu0
        %v425 = vadd.f32 %v286, %v424
        %v426 = vpop.f32.mrf.mxu0
        %427 = vmatprep.mubr.f32.mxu0 0.0
        %428 = vmatmul.mubr.f32.gmra.mxu0 %v264
        %v429 = vpop.f32.mrf.mxu0
        %v430 = vadd.f32 %v286, %v429
        %v431 = vpop.f32.mrf.mxu0
        %432 = vdwg.mxu0
        %433 = vst [vmem:[#allocation2] sm:$0xff] %v355
        %434 = vst [vmem:[#allocation2 + $0x8] sm:$0xff] %v360
        %435 = vst [vmem:[#allocation2 + $0x10] sm:$0xff] %v365
        %436 = vst [vmem:[#allocation2 + $0x18] sm:$0xff] %v370
        %437 = vst [vmem:[#allocation2 + $0x20] sm:$0xff] %v375
        %438 = vst [vmem:[#allocation2 + $0x28] sm:$0xff] %v380
        %439 = vst [vmem:[#allocation2 + $0x30] sm:$0xff] %v385
        %440 = vst [vmem:[#allocation2 + $0x38] sm:$0xff] %v390
        %441 = vst [vmem:[#allocation2 + $0x40] sm:$0xff] %v395
        %442 = vst [vmem:[#allocation2 + $0x48] sm:$0xff] %v400
        %443 = vst [vmem:[#allocation2 + $0x50] sm:$0xff] %v405
        %444 = vst [vmem:[#allocation2 + $0x58] sm:$0xff] %v410
        %445 = vst [vmem:[#allocation2 + $0x60] sm:$0xff] %v415
        %446 = vst [vmem:[#allocation2 + $0x68] sm:$0xff] %v420
        %447 = vst [vmem:[#allocation2 + $0x70] sm:$0xff] %v425
        %448 = vst [vmem:[#allocation2 + $0x78] sm:$0xff] %v430
      $region36: #{attention_forward.1} parent=31 // pred_fallthru
        _
      %s449 = smul.u32 %s21, 128
      %s450 = scalar_lea.vmem %s224, %s449
      %v451 = vld [vmem:[%s450] sm:$0xff]
      %v452 = vld [vmem:[%s450 + $0x8] sm:$0xff]
      %v453 = vld [vmem:[%s450 + $0x10] sm:$0xff]
      %v454 = vld [vmem:[%s450 + $0x18] sm:$0xff]
      %v455 = vld [vmem:[%s450 + $0x20] sm:$0xff]
      %v456 = vld [vmem:[%s450 + $0x28] sm:$0xff]
      %v457 = vld [vmem:[%s450 + $0x30] sm:$0xff]
      %v458 = vld [vmem:[%s450 + $0x38] sm:$0xff]
      %v459 = vld [vmem:[%s450 + $0x40] sm:$0xff]
      %v460 = vld [vmem:[%s450 + $0x48] sm:$0xff]
      %v461 = vld [vmem:[%s450 + $0x50] sm:$0xff]
      %v462 = vld [vmem:[%s450 + $0x58] sm:$0xff]
      %v463 = vld [vmem:[%s450 + $0x60] sm:$0xff]
      %v464 = vld [vmem:[%s450 + $0x68] sm:$0xff]
      %v465 = vld [vmem:[%s450 + $0x70] sm:$0xff]
      %v466 = vld [vmem:[%s450 + $0x78] sm:$0xff]
      %v467 = vld [vmem:[#allocation2] sm:$0xff]
      %v468 = vld [vmem:[#allocation2 + $0x8] sm:$0xff]
      %v469 = vld [vmem:[#allocation2 + $0x10] sm:$0xff]
      %v470 = vld [vmem:[#allocation2 + $0x18] sm:$0xff]
      %v471 = vld [vmem:[#allocation2 + $0x20] sm:$0xff]
      %v472 = vld [vmem:[#allocation2 + $0x28] sm:$0xff]
      %v473 = vld [vmem:[#allocation2 + $0x30] sm:$0xff]
      %v474 = vld [vmem:[#allocation2 + $0x38] sm:$0xff]
      %v475 = vld [vmem:[#allocation2 + $0x40] sm:$0xff]
      %v476 = vld [vmem:[#allocation2 + $0x48] sm:$0xff]
      %v477 = vld [vmem:[#allocation2 + $0x50] sm:$0xff]
      %v478 = vld [vmem:[#allocation2 + $0x58] sm:$0xff]
      %v479 = vld [vmem:[#allocation2 + $0x60] sm:$0xff]
      %v480 = vld [vmem:[#allocation2 + $0x68] sm:$0xff]
      %v481 = vld [vmem:[#allocation2 + $0x70] sm:$0xff]
      %v482 = vld [vmem:[#allocation2 + $0x78] sm:$0xff]
      %483 = vmatprep.subr.mxu0 0.0
      %484 = vmatpush1.xpose.msra.mxu0 %v482
      %485 = vmatprep.subr.mxu0 0.0
      %486 = vmatpush1.xpose.msra.mxu0 %v481
      %487 = vmatprep.subr.mxu0 0.0
      %488 = vmatpush1.xpose.msra.mxu0 %v480
      %489 = vmatprep.subr.mxu0 0.0
      %490 = vmatpush1.xpose.msra.mxu0 %v479
      %491 = vmatprep.subr.mxu0 0.0
      %492 = vmatpush1.xpose.msra.mxu0 %v478
      %493 = vmatprep.subr.mxu0 0.0
      %494 = vmatpush1.xpose.msra.mxu0 %v477
      %495 = vmatprep.subr.mxu0 0.0
      %496 = vmatpush1.xpose.msra.mxu0 %v476
      %497 = vmatprep.subr.mxu0 0.0
      %498 = vmatpush1.xpose.msra.mxu0 %v475
      %499 = vmatprep.subr.mxu0 0.0
      %500 = vmatpush1.xpose.msra.mxu0 %v474
      %501 = vmatprep.subr.mxu0 0.0
      %502 = vmatpush1.xpose.msra.mxu0 %v473
      %503 = vmatprep.subr.mxu0 0.0
      %504 = vmatpush1.xpose.msra.mxu0 %v472
      %505 = vmatprep.subr.mxu0 0.0
      %506 = vmatpush1.xpose.msra.mxu0 %v471
      %507 = vmatprep.subr.mxu0 0.0
      %508 = vmatpush1.xpose.msra.mxu0 %v470
      %509 = vmatprep.subr.mxu0 0.0
      %510 = vmatpush1.xpose.msra.mxu0 %v469
      %511 = vmatprep.subr.mxu0 0.0
      %512 = vmatpush1.xpose.msra.mxu0 %v468
      %513 = vmatprep.subr.mxu0 0.0
      %514 = vmatpush1.xpose.msra.mxu0 %v467
      %515 = vmatprep.subr.mxu0 0.0
      %516 = vmatpush2.xpose.msra.mxu0 0.0
      %517 = vmatprep.subr.mxu0 0.0
      %518 = vmatpush2.xpose.msra.mxu0 0.0
      %519 = vmatprep.subr.mxu0 0.0
      %520 = vmatpush2.xpose.msra.mxu0 0.0
      %521 = vmatprep.subr.mxu0 0.0
      %522 = vmatpush2.xpose.msra.mxu0 0.0
      %523 = vmatprep.subr.mxu0 0.0
      %524 = vmatpush2.xpose.msra.mxu0 0.0
      %525 = vmatprep.subr.mxu0 0.0
      %526 = vmatpush2.xpose.msra.mxu0 0.0
      %527 = vmatprep.subr.mxu0 0.0
      %528 = vmatpush2.xpose.msra.mxu0 0.0
      %529 = vmatprep.subr.mxu0 0.0
      %530 = vmatpush2.xpose.msra.mxu0 0.0
      %531 = vmatprep.subr.mxu0 0.0
      %532 = vmatpush2.xpose.msra.mxu0 0.0
      %533 = vmatprep.subr.mxu0 0.0
      %534 = vmatpush2.xpose.msra.mxu0 0.0
      %535 = vmatprep.subr.mxu0 0.0
      %536 = vmatpush2.xpose.msra.mxu0 0.0
      %537 = vmatprep.subr.mxu0 0.0
      %538 = vmatpush2.xpose.msra.mxu0 0.0
      %539 = vmatprep.subr.mxu0 0.0
      %540 = vmatpush2.xpose.msra.mxu0 0.0
      %541 = vmatprep.subr.mxu0 0.0
      %542 = vmatpush2.xpose.msra.mxu0 0.0
      %543 = vmatprep.subr.mxu0 0.0
      %544 = vmatpush2.xpose.msra.mxu0 0.0
      %545 = vmatprep.subr.mxu0 0.0
      %546 = vmatpush2.xpose.msra.mxu0 0.0
      %547 = vmatprep.mubr.f32.mxu0 0.0
      %548 = vmatmul.mubr.f32.gmra.mxu0 %v451
      %v549 = vpop.f32.mrf.mxu0
      %v550 = vadd.f32 0.0, %v549
      %v551 = vpop.f32.mrf.mxu0
      %552 = vmatprep.mubr.f32.mxu0 0.0
      %553 = vmatmul.mubr.f32.gmra.mxu0 %v452
      %v554 = vpop.f32.mrf.mxu0
      %v555 = vadd.f32 0.0, %v554
      %v556 = vpop.f32.mrf.mxu0
      %557 = vmatprep.mubr.f32.mxu0 0.0
      %558 = vmatmul.mubr.f32.gmra.mxu0 %v453
      %v559 = vpop.f32.mrf.mxu0
      %v560 = vadd.f32 0.0, %v559
      %v561 = vpop.f32.mrf.mxu0
      %562 = vmatprep.mubr.f32.mxu0 0.0
      %563 = vmatmul.mubr.f32.gmra.mxu0 %v454
      %v564 = vpop.f32.mrf.mxu0
      %v565 = vadd.f32 0.0, %v564
      %v566 = vpop.f32.mrf.mxu0
      %567 = vmatprep.mubr.f32.mxu0 0.0
      %568 = vmatmul.mubr.f32.gmra.mxu0 %v455
      %v569 = vpop.f32.mrf.mxu0
      %v570 = vadd.f32 0.0, %v569
      %v571 = vpop.f32.mrf.mxu0
      %572 = vmatprep.mubr.f32.mxu0 0.0
      %573 = vmatmul.mubr.f32.gmra.mxu0 %v456
      %v574 = vpop.f32.mrf.mxu0
      %v575 = vadd.f32 0.0, %v574
      %v576 = vpop.f32.mrf.mxu0
      %577 = vmatprep.mubr.f32.mxu0 0.0
      %578 = vmatmul.mubr.f32.gmra.mxu0 %v457
      %v579 = vpop.f32.mrf.mxu0
      %v580 = vadd.f32 0.0, %v579
      %v581 = vpop.f32.mrf.mxu0
      %582 = vmatprep.mubr.f32.mxu0 0.0
      %583 = vmatmul.mubr.f32.gmra.mxu0 %v458
      %v584 = vpop.f32.mrf.mxu0
      %v585 = vadd.f32 0.0, %v584
      %v586 = vpop.f32.mrf.mxu0
      %587 = vmatprep.mubr.f32.mxu0 0.0
      %588 = vmatmul.mubr.f32.gmra.mxu0 %v459
      %v589 = vpop.f32.mrf.mxu0
      %v590 = vadd.f32 0.0, %v589
      %v591 = vpop.f32.mrf.mxu0
      %592 = vmatprep.mubr.f32.mxu0 0.0
      %593 = vmatmul.mubr.f32.gmra.mxu0 %v460
      %v594 = vpop.f32.mrf.mxu0
      %v595 = vadd.f32 0.0, %v594
      %v596 = vpop.f32.mrf.mxu0
      %597 = vmatprep.mubr.f32.mxu0 0.0
      %598 = vmatmul.mubr.f32.gmra.mxu0 %v461
      %v599 = vpop.f32.mrf.mxu0
      %v600 = vadd.f32 0.0, %v599
      %v601 = vpop.f32.mrf.mxu0
      %602 = vmatprep.mubr.f32.mxu0 0.0
      %603 = vmatmul.mubr.f32.gmra.mxu0 %v462
      %v604 = vpop.f32.mrf.mxu0
      %v605 = vadd.f32 0.0, %v604
      %v606 = vpop.f32.mrf.mxu0
      %607 = vmatprep.mubr.f32.mxu0 0.0
      %608 = vmatmul.mubr.f32.gmra.mxu0 %v463
      %v609 = vpop.f32.mrf.mxu0
      %v610 = vadd.f32 0.0, %v609
      %v611 = vpop.f32.mrf.mxu0
      %612 = vmatprep.mubr.f32.mxu0 0.0
      %613 = vmatmul.mubr.f32.gmra.mxu0 %v464
      %v614 = vpop.f32.mrf.mxu0
      %v615 = vadd.f32 0.0, %v614
      %v616 = vpop.f32.mrf.mxu0
      %617 = vmatprep.mubr.f32.mxu0 0.0
      %618 = vmatmul.mubr.f32.gmra.mxu0 %v465
      %v619 = vpop.f32.mrf.mxu0
      %v620 = vadd.f32 0.0, %v619
      %v621 = vpop.f32.mrf.mxu0
      %622 = vmatprep.mubr.f32.mxu0 0.0
      %623 = vmatmul.mubr.f32.gmra.mxu0 %v466
      %v624 = vpop.f32.mrf.mxu0
      %v625 = vadd.f32 0.0, %v624
      %v626 = vpop.f32.mrf.mxu0
      %627 = vdwg.mxu0
      %v628 = vlaneseq
      %v629 = vand.u32 %v628, 127
      %vm630 = vcmp.lt.s32.totalorder %v629, 8
      %v631 = vsel %vm630, %v550, -1e+30
      %v632 = vsel %vm630, %v555, -1e+30
      %v633 = vsel %vm630, %v560, -1e+30
      %v634 = vsel %vm630, %v565, -1e+30
      %v635 = vsel %vm630, %v570, -1e+30
      %v636 = vsel %vm630, %v575, -1e+30
      %v637 = vsel %vm630, %v580, -1e+30
      %v638 = vsel %vm630, %v585, -1e+30
      %v639 = vsel %vm630, %v590, -1e+30
      %v640 = vsel %vm630, %v595, -1e+30
      %v641 = vsel %vm630, %v600, -1e+30
      %v642 = vsel %vm630, %v605, -1e+30
      %v643 = vsel %vm630, %v610, -1e+30
      %v644 = vsel %vm630, %v615, -1e+30
      %v645 = vsel %vm630, %v620, -1e+30
      %v646 = vsel %vm630, %v625, -1e+30
      %647 = vmax.xlane.f32.xlu0 %v631
      %v648 = vpop.xlane.xlu0 %647
      %649 = vmax.xlane.f32.xlu0 %v632
      %v650 = vpop.xlane.xlu0 %649
      %651 = vmax.xlane.f32.xlu0 %v633
      %v652 = vpop.xlane.xlu0 %651
      %653 = vmax.xlane.f32.xlu0 %v634
      %v654 = vpop.xlane.xlu0 %653
      %655 = vmax.xlane.f32.xlu0 %v635
      %v656 = vpop.xlane.xlu0 %655
      %657 = vmax.xlane.f32.xlu0 %v636
      %v658 = vpop.xlane.xlu0 %657
      %659 = vmax.xlane.f32.xlu0 %v637
      %v660 = vpop.xlane.xlu0 %659
      %661 = vmax.xlane.f32.xlu0 %v638
      %v662 = vpop.xlane.xlu0 %661
      %663 = vmax.xlane.f32.xlu0 %v639
      %v664 = vpop.xlane.xlu0 %663
      %665 = vmax.xlane.f32.xlu0 %v640
      %v666 = vpop.xlane.xlu0 %665
      %667 = vmax.xlane.f32.xlu0 %v641
      %v668 = vpop.xlane.xlu0 %667
      %669 = vmax.xlane.f32.xlu0 %v642
      %v670 = vpop.xlane.xlu0 %669
      %671 = vmax.xlane.f32.xlu0 %v643
      %v672 = vpop.xlane.xlu0 %671
      %673 = vmax.xlane.f32.xlu0 %v644
      %v674 = vpop.xlane.xlu0 %673
      %675 = vmax.xlane.f32.xlu0 %v645
      %v676 = vpop.xlane.xlu0 %675
      %677 = vmax.xlane.f32.xlu0 %v646
      %v678 = vpop.xlane.xlu0 %677
      %v679 = vsub.f32 %v631, %v648
      %v680 = vsub.f32 %v632, %v650
      %v681 = vsub.f32 %v633, %v652
      %v682 = vsub.f32 %v634, %v654
      %v683 = vsub.f32 %v635, %v656
      %v684 = vsub.f32 %v636, %v658
      %v685 = vsub.f32 %v637, %v660
      %v686 = vsub.f32 %v638, %v662
      %v687 = vsub.f32 %v639, %v664
      %v688 = vsub.f32 %v640, %v666
      %v689 = vsub.f32 %v641, %v668
      %v690 = vsub.f32 %v642, %v670
      %v691 = vsub.f32 %v643, %v672
      %v692 = vsub.f32 %v644, %v674
      %v693 = vsub.f32 %v645, %v676
      %v694 = vsub.f32 %v646, %v678
      %v695 = vmul.f32 %v679, 1.442695
      %v696 = vpow.pop %v695
      %v697 = vmul.f32 %v680, 1.442695
      %v698 = vpow.pop %v697
      %v699 = vmul.f32 %v681, 1.442695
      %v700 = vpow.pop %v699
      %v701 = vmul.f32 %v682, 1.442695
      %v702 = vpow.pop %v701
      %v703 = vmul.f32 %v683, 1.442695
      %v704 = vpow.pop %v703
      %v705 = vmul.f32 %v684, 1.442695
      %v706 = vpow.pop %v705
      %v707 = vmul.f32 %v685, 1.442695
      %v708 = vpow.pop %v707
      %v709 = vmul.f32 %v686, 1.442695
      %v710 = vpow.pop %v709
      %v711 = vmul.f32 %v687, 1.442695
      %v712 = vpow.pop %v711
      %v713 = vmul.f32 %v688, 1.442695
      %v714 = vpow.pop %v713
      %v715 = vmul.f32 %v689, 1.442695
      %v716 = vpow.pop %v715
      %v717 = vmul.f32 %v690, 1.442695
      %v718 = vpow.pop %v717
      %v719 = vmul.f32 %v691, 1.442695
      %v720 = vpow.pop %v719
      %v721 = vmul.f32 %v692, 1.442695
      %v722 = vpow.pop %v721
      %v723 = vmul.f32 %v693, 1.442695
      %v724 = vpow.pop %v723
      %v725 = vmul.f32 %v694, 1.442695
      %v726 = vpow.pop %v725
      %727 = vadd.xlane.f32.xlu0 %v696
      %v728 = vpop.xlane.xlu0 %727
      %729 = vadd.xlane.f32.xlu0 %v698
      %v730 = vpop.xlane.xlu0 %729
      %731 = vadd.xlane.f32.xlu0 %v700
      %v732 = vpop.xlane.xlu0 %731
      %733 = vadd.xlane.f32.xlu0 %v702
      %v734 = vpop.xlane.xlu0 %733
      %735 = vadd.xlane.f32.xlu0 %v704
      %v736 = vpop.xlane.xlu0 %735
      %737 = vadd.xlane.f32.xlu0 %v706
      %v738 = vpop.xlane.xlu0 %737
      %739 = vadd.xlane.f32.xlu0 %v708
      %v740 = vpop.xlane.xlu0 %739
      %741 = vadd.xlane.f32.xlu0 %v710
      %v742 = vpop.xlane.xlu0 %741
      %743 = vadd.xlane.f32.xlu0 %v712
      %v744 = vpop.xlane.xlu0 %743
      %745 = vadd.xlane.f32.xlu0 %v714
      %v746 = vpop.xlane.xlu0 %745
      %747 = vadd.xlane.f32.xlu0 %v716
      %v748 = vpop.xlane.xlu0 %747
      %749 = vadd.xlane.f32.xlu0 %v718
      %v750 = vpop.xlane.xlu0 %749
      %751 = vadd.xlane.f32.xlu0 %v720
      %v752 = vpop.xlane.xlu0 %751
      %753 = vadd.xlane.f32.xlu0 %v722
      %v754 = vpop.xlane.xlu0 %753
      %755 = vadd.xlane.f32.xlu0 %v724
      %v756 = vpop.xlane.xlu0 %755
      %757 = vadd.xlane.f32.xlu0 %v726
      %v758 = vpop.xlane.xlu0 %757
      %v759 = vrcp.pop %v728
      %v760 = vmul.f32 %v696, %v759
      %v761 = vrcp.pop %v730
      %v762 = vmul.f32 %v698, %v761
      %v763 = vrcp.pop %v732
      %v764 = vmul.f32 %v700, %v763
      %v765 = vrcp.pop %v734
      %v766 = vmul.f32 %v702, %v765
      %v767 = vrcp.pop %v736
      %v768 = vmul.f32 %v704, %v767
      %v769 = vrcp.pop %v738
      %v770 = vmul.f32 %v706, %v769
      %v771 = vrcp.pop %v740
      %v772 = vmul.f32 %v708, %v771
      %v773 = vrcp.pop %v742
      %v774 = vmul.f32 %v710, %v773
      %v775 = vrcp.pop %v744
      %v776 = vmul.f32 %v712, %v775
      %v777 = vrcp.pop %v746
      %v778 = vmul.f32 %v714, %v777
      %v779 = vrcp.pop %v748
      %v780 = vmul.f32 %v716, %v779
      %v781 = vrcp.pop %v750
      %v782 = vmul.f32 %v718, %v781
      %v783 = vrcp.pop %v752
      %v784 = vmul.f32 %v720, %v783
      %v785 = vrcp.pop %v754
      %v786 = vmul.f32 %v722, %v785
      %v787 = vrcp.pop %v756
      %v788 = vmul.f32 %v724, %v787
      %v789 = vrcp.pop %v758
      %v790 = vmul.f32 %v726, %v789
      %791 = vst [vmem:[%s243] sm:$0xff] %v760
      %792 = vst [vmem:[%s243 + $0x8] sm:$0xff] %v762
      %793 = vst [vmem:[%s243 + $0x10] sm:$0xff] %v764
      %794 = vst [vmem:[%s243 + $0x18] sm:$0xff] %v766
      %795 = vst [vmem:[%s243 + $0x20] sm:$0xff] %v768
      %796 = vst [vmem:[%s243 + $0x28] sm:$0xff] %v770
      %797 = vst [vmem:[%s243 + $0x30] sm:$0xff] %v772
      %798 = vst [vmem:[%s243 + $0x38] sm:$0xff] %v774
      %799 = vst [vmem:[%s243 + $0x40] sm:$0xff] %v776
      %800 = vst [vmem:[%s243 + $0x48] sm:$0xff] %v778
      %801 = vst [vmem:[%s243 + $0x50] sm:$0xff] %v780
      %802 = vst [vmem:[%s243 + $0x58] sm:$0xff] %v782
      %803 = vst [vmem:[%s243 + $0x60] sm:$0xff] %v784
      %804 = vst [vmem:[%s243 + $0x68] sm:$0xff] %v786
      %805 = vst [vmem:[%s243 + $0x70] sm:$0xff] %v788
      %806 = vst [vmem:[%s243 + $0x78] sm:$0xff] %v790
      %v807 = vld [vmem:[%s224] sm:$0xff]
      %v808 = vld [vmem:[%s224 + $0x8] sm:$0xff]
      %v809 = vld [vmem:[%s224 + $0x10] sm:$0xff]
      %v810 = vld [vmem:[%s224 + $0x18] sm:$0xff]
      %v811 = vld [vmem:[%s224 + $0x20] sm:$0xff]
      %v812 = vld [vmem:[%s224 + $0x28] sm:$0xff]
      %v813 = vld [vmem:[%s224 + $0x30] sm:$0xff]
      %v814 = vld [vmem:[%s224 + $0x38] sm:$0xff]
      %v815 = vld [vmem:[%s224 + $0x40] sm:$0xff]
      %v816 = vld [vmem:[%s224 + $0x48] sm:$0xff]
      %v817 = vld [vmem:[%s224 + $0x50] sm:$0xff]
      %v818 = vld [vmem:[%s224 + $0x58] sm:$0xff]
      %v819 = vld [vmem:[%s224 + $0x60] sm:$0xff]
      %v820 = vld [vmem:[%s224 + $0x68] sm:$0xff]
      %v821 = vld [vmem:[%s224 + $0x70] sm:$0xff]
      %v822 = vld [vmem:[%s224 + $0x78] sm:$0xff]
      %823 = vmatprep.subr.mxu0 0.0
      %824 = vmatpush1.msra.mxu0 %v822
      %825 = vmatprep.subr.mxu0 0.0
      %826 = vmatpush1.msra.mxu0 %v821
      %827 = vmatprep.subr.mxu0 0.0
      %828 = vmatpush1.msra.mxu0 %v820
      %829 = vmatprep.subr.mxu0 0.0
      %830 = vmatpush1.msra.mxu0 %v819
      %831 = vmatprep.subr.mxu0 0.0
      %832 = vmatpush1.msra.mxu0 %v818
      %833 = vmatprep.subr.mxu0 0.0
      %834 = vmatpush1.msra.mxu0 %v817
      %835 = vmatprep.subr.mxu0 0.0
      %836 = vmatpush1.msra.mxu0 %v816
      %837 = vmatprep.subr.mxu0 0.0
      %838 = vmatpush1.msra.mxu0 %v815
      %839 = vmatprep.subr.mxu0 0.0
      %840 = vmatpush1.msra.mxu0 %v814
      %841 = vmatprep.subr.mxu0 0.0
      %842 = vmatpush1.msra.mxu0 %v813
      %843 = vmatprep.subr.mxu0 0.0
      %844 = vmatpush1.msra.mxu0 %v812
      %845 = vmatprep.subr.mxu0 0.0
      %846 = vmatpush1.msra.mxu0 %v811
      %847 = vmatprep.subr.mxu0 0.0
      %848 = vmatpush1.msra.mxu0 %v810
      %849 = vmatprep.subr.mxu0 0.0
      %850 = vmatpush1.msra.mxu0 %v809
      %851 = vmatprep.subr.mxu0 0.0
      %852 = vmatpush1.msra.mxu0 %v808
      %853 = vmatprep.subr.mxu0 0.0
      %854 = vmatpush1.msra.mxu0 %v807
      %855 = vmatprep.subr.mxu0 0.0
      %856 = vmatpush2.msra.mxu0 0.0
      %857 = vmatprep.subr.mxu0 0.0
      %858 = vmatpush2.msra.mxu0 0.0
      %859 = vmatprep.subr.mxu0 0.0
      %860 = vmatpush2.msra.mxu0 0.0
      %861 = vmatprep.subr.mxu0 0.0
      %862 = vmatpush2.msra.mxu0 0.0
      %863 = vmatprep.subr.mxu0 0.0
      %864 = vmatpush2.msra.mxu0 0.0
      %865 = vmatprep.subr.mxu0 0.0
      %866 = vmatpush2.msra.mxu0 0.0
      %867 = vmatprep.subr.mxu0 0.0
      %868 = vmatpush2.msra.mxu0 0.0
      %869 = vmatprep.subr.mxu0 0.0
      %870 = vmatpush2.msra.mxu0 0.0
      %871 = vmatprep.subr.mxu0 0.0
      %872 = vmatpush2.msra.mxu0 0.0
      %873 = vmatprep.subr.mxu0 0.0
      %874 = vmatpush2.msra.mxu0 0.0
      %875 = vmatprep.subr.mxu0 0.0
      %876 = vmatpush2.msra.mxu0 0.0
      %877 = vmatprep.subr.mxu0 0.0
      %878 = vmatpush2.msra.mxu0 0.0
      %879 = vmatprep.subr.mxu0 0.0
      %880 = vmatpush2.msra.mxu0 0.0
      %881 = vmatprep.subr.mxu0 0.0
      %882 = vmatpush2.msra.mxu0 0.0
      %883 = vmatprep.subr.mxu0 0.0
      %884 = vmatpush2.msra.mxu0 0.0
      %885 = vmatprep.subr.mxu0 0.0
      %886 = vmatpush2.msra.mxu0 0.0
      %887 = vmatprep.mubr.f32.mxu0 0.0
      %888 = vmatmul.mubr.f32.gmra.mxu0 %v760
      %v889 = vpop.f32.mrf.mxu0
      %v890 = vadd.f32 0.0, %v889
      %v891 = vpop.f32.mrf.mxu0
      %892 = vmatprep.mubr.f32.mxu0 0.0
      %893 = vmatmul.mubr.f32.gmra.mxu0 %v762
      %v894 = vpop.f32.mrf.mxu0
      %v895 = vadd.f32 0.0, %v894
      %v896 = vpop.f32.mrf.mxu0
      %897 = vmatprep.mubr.f32.mxu0 0.0
      %898 = vmatmul.mubr.f32.gmra.mxu0 %v764
      %v899 = vpop.f32.mrf.mxu0
      %v900 = vadd.f32 0.0, %v899
      %v901 = vpop.f32.mrf.mxu0
      %902 = vmatprep.mubr.f32.mxu0 0.0
      %903 = vmatmul.mubr.f32.gmra.mxu0 %v766
      %v904 = vpop.f32.mrf.mxu0
      %v905 = vadd.f32 0.0, %v904
      %v906 = vpop.f32.mrf.mxu0
      %907 = vmatprep.mubr.f32.mxu0 0.0
      %908 = vmatmul.mubr.f32.gmra.mxu0 %v768
      %v909 = vpop.f32.mrf.mxu0
      %v910 = vadd.f32 0.0, %v909
      %v911 = vpop.f32.mrf.mxu0
      %912 = vmatprep.mubr.f32.mxu0 0.0
      %913 = vmatmul.mubr.f32.gmra.mxu0 %v770
      %v914 = vpop.f32.mrf.mxu0
      %v915 = vadd.f32 0.0, %v914
      %v916 = vpop.f32.mrf.mxu0
      %917 = vmatprep.mubr.f32.mxu0 0.0
      %918 = vmatmul.mubr.f32.gmra.mxu0 %v772
      %v919 = vpop.f32.mrf.mxu0
      %v920 = vadd.f32 0.0, %v919
      %v921 = vpop.f32.mrf.mxu0
      %922 = vmatprep.mubr.f32.mxu0 0.0
      %923 = vmatmul.mubr.f32.gmra.mxu0 %v774
      %v924 = vpop.f32.mrf.mxu0
      %v925 = vadd.f32 0.0, %v924
      %v926 = vpop.f32.mrf.mxu0
      %927 = vmatprep.mubr.f32.mxu0 0.0
      %928 = vmatmul.mubr.f32.gmra.mxu0 %v776
      %v929 = vpop.f32.mrf.mxu0
      %v930 = vadd.f32 0.0, %v929
      %v931 = vpop.f32.mrf.mxu0
      %932 = vmatprep.mubr.f32.mxu0 0.0
      %933 = vmatmul.mubr.f32.gmra.mxu0 %v778
      %v934 = vpop.f32.mrf.mxu0
      %v935 = vadd.f32 0.0, %v934
      %v936 = vpop.f32.mrf.mxu0
      %937 = vmatprep.mubr.f32.mxu0 0.0
      %938 = vmatmul.mubr.f32.gmra.mxu0 %v780
      %v939 = vpop.f32.mrf.mxu0
      %v940 = vadd.f32 0.0, %v939
      %v941 = vpop.f32.mrf.mxu0
      %942 = vmatprep.mubr.f32.mxu0 0.0
      %943 = vmatmul.mubr.f32.gmra.mxu0 %v782
      %v944 = vpop.f32.mrf.mxu0
      %v945 = vadd.f32 0.0, %v944
      %v946 = vpop.f32.mrf.mxu0
      %947 = vmatprep.mubr.f32.mxu0 0.0
      %948 = vmatmul.mubr.f32.gmra.mxu0 %v784
      %v949 = vpop.f32.mrf.mxu0
      %v950 = vadd.f32 0.0, %v949
      %v951 = vpop.f32.mrf.mxu0
      %952 = vmatprep.mubr.f32.mxu0 0.0
      %953 = vmatmul.mubr.f32.gmra.mxu0 %v786
      %v954 = vpop.f32.mrf.mxu0
      %v955 = vadd.f32 0.0, %v954
      %v956 = vpop.f32.mrf.mxu0
      %957 = vmatprep.mubr.f32.mxu0 0.0
      %958 = vmatmul.mubr.f32.gmra.mxu0 %v788
      %v959 = vpop.f32.mrf.mxu0
      %v960 = vadd.f32 0.0, %v959
      %v961 = vpop.f32.mrf.mxu0
      %962 = vmatprep.mubr.f32.mxu0 0.0
      %963 = vmatmul.mubr.f32.gmra.mxu0 %v790
      %v964 = vpop.f32.mrf.mxu0
      %v965 = vadd.f32 0.0, %v964
      %v966 = vpop.f32.mrf.mxu0
      %967 = vdwg.mxu0
      %968 = vst [vmem:[%s233] sm:$0xff] %v890
      %969 = vst [vmem:[%s233 + $0x8] sm:$0xff] %v895
      %970 = vst [vmem:[%s233 + $0x10] sm:$0xff] %v900
      %971 = vst [vmem:[%s233 + $0x18] sm:$0xff] %v905
      %972 = vst [vmem:[%s233 + $0x20] sm:$0xff] %v910
      %973 = vst [vmem:[%s233 + $0x28] sm:$0xff] %v915
      %974 = vst [vmem:[%s233 + $0x30] sm:$0xff] %v920
      %975 = vst [vmem:[%s233 + $0x38] sm:$0xff] %v925
      %976 = vst [vmem:[%s233 + $0x40] sm:$0xff] %v930
      %977 = vst [vmem:[%s233 + $0x48] sm:$0xff] %v935
      %978 = vst [vmem:[%s233 + $0x50] sm:$0xff] %v940
      %979 = vst [vmem:[%s233 + $0x58] sm:$0xff] %v945
      %980 = vst [vmem:[%s233 + $0x60] sm:$0xff] %v950
      %981 = vst [vmem:[%s233 + $0x68] sm:$0xff] %v955
      %982 = vst [vmem:[%s233 + $0x70] sm:$0xff] %v960
      %983 = vst [vmem:[%s233 + $0x78] sm:$0xff] %v965
      %s984 = smul.u32 16, %s21
      %p985 = scmp.lt.s32.totalorder %s20, 1
      %s986 = scalar_select %p985, %s20, 1
      %p987 = scmp.lt.s32.totalorder %s984, 15
      %s988 = scalar_select %p987, %s984, 15
      %s989 = smul.addr %s986, 16
      %s990 = sadd.s32 %s988, %s989
      %s991 = smul.addr %s990, 8
      %s992 = scalar_lea.vmem %s3, %s991
      %s993 = smul.u32 16, %s21
      %p994 = scmp.lt.s32.totalorder %s20, 1
      %s995 = scalar_select %p994, %s20, 1
      %p996 = scmp.lt.s32.totalorder %s993, 15
      %s997 = scalar_select %p996, %s993, 15
      %s998 = smul.addr %s995, 16
      %s999 = sadd.s32 %s997, %s998
      %s1000 = smul.addr %s999, 8
      %s1001 = scalar_lea.vmem %s4, %s1000
      // Predicated region
      $region37: #{attention_forward.1} parent=31 // pred_check
        %p1002 = pneg %p116
      $region38: #{attention_forward.1} parent=31 // pred_check_branch
        %1004 = sbr.rel (%p1002) target = $region40
      $region39: #{attention_forward.1} parent=31 // pred_region
        %s1005 = smul.u32 16, %s21
      $region40: #{attention_forward.1} parent=31 // pred_fallthru
        _
      // Predicated region
      $region41: #{attention_forward.1} parent=31 // pred_check
        %p1006 = pneg %p144
      $region42: #{attention_forward.1} parent=31 // pred_check_branch
        %1008 = sbr.rel (%p1006) target = $region44
      $region43: #{attention_forward.1} parent=31 // pred_region
        %s1009 = smul.u32 16, %s21
      $region44: #{attention_forward.1} parent=31 // pred_fallthru
        _
    $region32: #{attention_forward.1} parent=5 // pred_fallthru
      _
    %p1010 = scmp.le.s32.totalorder 2, %s11
    // Predicated region
    $region45: #{attention_forward.1} parent=5 // pred_check
      %p1011 = pneg %p1010
    $region46: #{attention_forward.1} parent=5 // pred_check_branch
      %1013 = sbr.rel (%p1011) target = $region48
    $region47: #{attention_forward.1} parent=5 // pred_region
      %s1014 = ssub.s32 %s11, 2
      // Predicated region
      $region49: #{attention_forward.1} parent=47 // pred_check
        %p1015 = pneg %p122
      $region50: #{attention_forward.1} parent=47 // pred_check_branch
        %1017 = sbr.rel (%p1015) target = $region52
      $region51: #{attention_forward.1} parent=47 // pred_region
        %s1018 = smul.u32 16, %s23
        %p1019 = scmp.lt.s32.totalorder %s22, 1
        %s1020 = scalar_select %p1019, %s22, 1
        %p1021 = scmp.lt.s32.totalorder %s1018, 15
        %s1022 = scalar_select %p1021, %s1018, 15
        %s1023 = smul.addr %s1020, 16
        %s1024 = sadd.s32 %s1022, %s1023
        %s1025 = smul.addr %s1024, 8
        %s1026 = scalar_lea.vmem %s3, %s1025
      $region52: #{attention_forward.1} parent=47 // pred_fallthru
        _
      // Predicated region
      $region53: #{attention_forward.1} parent=47 // pred_check
        %p1027 = pneg %p150
      $region54: #{attention_forward.1} parent=47 // pred_check_branch
        %1029 = sbr.rel (%p1027) target = $region56
      $region55: #{attention_forward.1} parent=47 // pred_region
        %s1030 = smul.u32 16, %s23
        %p1031 = scmp.lt.s32.totalorder %s22, 1
        %s1032 = scalar_select %p1031, %s22, 1
        %p1033 = scmp.lt.s32.totalorder %s1030, 15
        %s1034 = scalar_select %p1033, %s1030, 15
        %s1035 = smul.addr %s1032, 16
        %s1036 = sadd.s32 %s1034, %s1035
        %s1037 = smul.addr %s1036, 8
        %s1038 = scalar_lea.vmem %s4, %s1037
      $region56: #{attention_forward.1} parent=47 // pred_fallthru
        _
    $region48: #{attention_forward.1} parent=5 // pred_fallthru
      _
  $region6: #{attention_forward.1} parent=0 // loop_footer
    %s15 = sadd.s32 1, %s11
  $region7: #{attention_forward.1} parent=0 // loop_footer_branch
    %10 = sbr.rel target = $region3
  $region8: #{attention_forward.1} parent=0 // loop_exit
    _

</llo_original>
